<compile_context>
chip_gen: v7x
topology: tpu7x:2x2x1
jax: 0.10.0
libtpu: 0.0.40
codegen_flags: <defaults>
</compile_context>

<pallas_src>
import jax
import jax.numpy as jnp
from jax.experimental import pallas as pl
from jax.experimental.pallas import tpu as pltpu

_EPS = 1e-5


def fused_conv_bn_relu(x_flat, params, *, cin, eps=_EPS):
    """Fused 1x1-conv + training-mode BN + ReLU over the full padded tensor.

    Args:
      x_flat: (N, Cin, P) f32 zero-padded input, P = (H+2)*(W+2).
      params: (Cout, Cin+2) f32 fused parameters [conv_w | bn_gamma | bn_beta].
      cin:    number of input channels (static).

    Returns:
      (N, Cout, P) f32 BN+ReLU of the padded conv output.
    """
    N, Cin, P = x_flat.shape
    assert Cin == cin
    Cout = params.shape[0]
    inv_m = 1.0 / float(N * P)   # BN statistics count every padded position

    def kernel(x_ref, p_ref, o_ref):
        x = x_ref[...]                                  # (N, Cin, P)
        p = p_ref[...]                                  # (Cout, Cin+2)
        w = p[:, 0:Cin]                                 # (Cout, Cin)
        gamma = p[:, Cin:Cin + 1]                       # (Cout, 1)
        beta = p[:, Cin + 1:Cin + 2]                    # (Cout, 1)

        # 1x1 conv (bias folded out) as Cin broadcast-FMAs on the VPU.
        z = x[:, 0:1, :] * w[None, :, 0:1]              # (N, Cout, P)
        for ci in range(1, Cin):                        # static, Cin=3
            z = z + x[:, ci:ci + 1, :] * w[None, :, ci:ci + 1]

        # Training-mode batch statistics over all N*P positions (border z==0).
        mean = jnp.sum(jnp.sum(z, axis=0, keepdims=True),
                       axis=2, keepdims=True) * inv_m   # (1, Cout, 1)
        d = z - mean
        var = jnp.sum(jnp.sum(d * d, axis=0, keepdims=True),
                      axis=2, keepdims=True) * inv_m    # centered two-pass
        inv_std = jax.lax.rsqrt(var + eps)              # EUP

        scale = gamma[None, :, :] * inv_std             # (1, Cout, 1)
        o_ref[...] = jnp.maximum(d * scale + beta[None, :, :], 0.0)

    return pl.pallas_call(
        kernel,
        out_shape=jax.ShapeDtypeStruct((N, Cout, P), jnp.float32),
        in_specs=[
            pl.BlockSpec(memory_space=pltpu.MemorySpace.VMEM),
            pl.BlockSpec(memory_space=pltpu.MemorySpace.VMEM),
        ],
        out_specs=pl.BlockSpec(memory_space=pltpu.MemorySpace.VMEM),
    )(x_flat, params)


@jax.jit
def model_forward(x_nchw, conv_w, conv_b, bn_gamma, bn_beta):
    N, Cin, H, W = x_nchw.shape
    Cout = conv_w.shape[0]
    # Fusion math requires a 1x1 conv kernel (padding border output == bias,
    # which cancels under training-mode BN).
    assert conv_w.shape[2:] == (1, 1)
    Hp, Wp = H + 2, W + 2
    P = Hp * Wp

    # Whole-problem-in-VMEM design: keep well under the 32 MiB scoped VMEM
    # default (v7x has only 64 MiB physical; re-derive tiling before scaling
    # this design up to larger N/H/W).
    vmem_bytes = 4 * (N * Cin * P + Cout * (Cin + 2) + N * Cout * P)
    assert vmem_bytes < 24 * 1024 * 1024, "problem too large for no-grid design"

    # conv_b is intentionally unused: the conv bias cancels under
    # training-mode batch-norm normalization (y - mean(y) is bias-free).
    del conv_b

    # Tiny pad + free reshapes; everything else happens inside the kernel.
    xp = jnp.pad(x_nchw, ((0, 0), (0, 0), (1, 1), (1, 1)))
    x_flat = xp.reshape(N, Cin, P)
    params = jnp.concatenate(
        [conv_w.reshape(Cout, Cin),
         bn_gamma.reshape(Cout, 1),
         bn_beta.reshape(Cout, 1)], axis=1)             # (Cout, Cin+2)

    out = fused_conv_bn_relu(x_flat, params, cin=Cin)
    return out.reshape(N, Cout, Hp, Wp)


def _reference(x_nchw, conv_w, conv_b, bn_gamma, bn_beta, eps=_EPS):
    """Pure-jnp reference with the full (bias-included) math."""
    N, Cin, H, W = x_nchw.shape
    Cout = conv_w.shape[0]
    xp = jnp.pad(x_nchw, ((0, 0), (0, 0), (1, 1), (1, 1)))
    y = jnp.einsum("oc,nchw->nohw", conv_w.reshape(Cout, Cin), xp)
    y = y + conv_b.reshape(1, Cout, 1, 1)
    mean = jnp.mean(y, axis=(0, 2, 3), keepdims=True)
    var = jnp.var(y, axis=(0, 2, 3), keepdims=True)  # biased, like PyTorch
    yn = (y - mean) / jnp.sqrt(var + eps)
    yn = yn * bn_gamma.reshape(1, Cout, 1, 1) + bn_beta.reshape(1, Cout, 1, 1)
    return jnp.maximum(yn, 0.0)


if __name__ == "__main__":
    key = jax.random.PRNGKey(0)
    k_x, k_w, k_b, k_g, k_be = jax.random.split(key, 5)

    # Small shapes: N=2, Cin=3, H=W=14 -> padded output 16x16 (lane dim 256).
    N, Cin, H, W = 2, 3, 14, 14
    Cout = 16

    x = jax.random.normal(k_x, (N, Cin, H, W), dtype=jnp.float32)
    conv_w = jax.random.normal(k_w, (Cout, Cin, 1, 1), dtype=jnp.float32) * 0.2
    conv_b = jax.random.normal(k_b, (Cout,), dtype=jnp.float32) * 0.1
    bn_gamma = 1.0 + 0.1 * jax.random.normal(k_g, (Cout,), dtype=jnp.float32)
    bn_beta = 0.1 * jax.random.normal(k_be, (Cout,), dtype=jnp.float32)

    out = model_forward(x, conv_w, conv_b, bn_gamma, bn_beta)
    jax.block_until_ready(out)
    assert out.shape == (N, Cout, H + 2, W + 2)

    ref = _reference(x, conv_w, conv_b, bn_gamma, bn_beta)
    err = float(jnp.max(jnp.abs(out - ref)))
    assert err < 1e-4, f"max abs error vs reference: {err}"

    print("KERNEL_OK")
</pallas_src>

<mosaic_0001>
module attributes {stable_mosaic.version = 11 : i64} {
  func.func @kernel(%arg0: memref<2x3x256xf32, #tpu.memory_space<vmem>>, %arg1: memref<16x5xf32, #tpu.memory_space<vmem>>, %arg2: memref<2x16x256xf32, #tpu.memory_space<vmem>>) attributes {dimension_semantics = [], scalar_prefetch = 0 : i64, scratch_operands = 0 : i64, tpu.core_type = #tpu.core_type<tc>} {
    %c0 = arith.constant 0 : index
    %c0_0 = arith.constant 0 : index
    %c0_1 = arith.constant 0 : index
    %0 = vector.load %arg0[%c0, %c0_0, %c0_1] : memref<2x3x256xf32, #tpu.memory_space<vmem>>, vector<2x3x256xf32>
    %c0_2 = arith.constant 0 : index
    %c0_3 = arith.constant 0 : index
    %1 = vector.load %arg1[%c0_2, %c0_3] : memref<16x5xf32, #tpu.memory_space<vmem>>, vector<16x5xf32>
    %2 = vector.extract_strided_slice %1 {offsets = [0, 0], sizes = [16, 3], strides = [1, 1]} : vector<16x5xf32> to vector<16x3xf32>
    %3 = vector.extract_strided_slice %1 {offsets = [0, 3], sizes = [16, 1], strides = [1, 1]} : vector<16x5xf32> to vector<16x1xf32>
    %4 = vector.extract_strided_slice %1 {offsets = [0, 4], sizes = [16, 1], strides = [1, 1]} : vector<16x5xf32> to vector<16x1xf32>
    %5 = vector.extract_strided_slice %0 {offsets = [0, 0, 0], sizes = [2, 1, 256], strides = [1, 1, 1]} : vector<2x3x256xf32> to vector<2x1x256xf32>
    %6 = vector.extract_strided_slice %2 {offsets = [0, 0], sizes = [16, 1], strides = [1, 1]} : vector<16x3xf32> to vector<16x1xf32>
    %7 = vector.shape_cast %6 : vector<16x1xf32> to vector<1x16x1xf32>
    %8 = vector.broadcast %5 : vector<2x1x256xf32> to vector<2x16x256xf32>
    %9 = vector.broadcast %7 : vector<1x16x1xf32> to vector<2x16x256xf32>
    %10 = arith.mulf %8, %9 : vector<2x16x256xf32>
    %11 = vector.extract_strided_slice %0 {offsets = [0, 1, 0], sizes = [2, 1, 256], strides = [1, 1, 1]} : vector<2x3x256xf32> to vector<2x1x256xf32>
    %12 = vector.extract_strided_slice %2 {offsets = [0, 1], sizes = [16, 1], strides = [1, 1]} : vector<16x3xf32> to vector<16x1xf32>
    %13 = vector.shape_cast %12 : vector<16x1xf32> to vector<1x16x1xf32>
    %14 = vector.broadcast %11 : vector<2x1x256xf32> to vector<2x16x256xf32>
    %15 = vector.broadcast %13 : vector<1x16x1xf32> to vector<2x16x256xf32>
    %16 = arith.mulf %14, %15 : vector<2x16x256xf32>
    %17 = arith.addf %10, %16 : vector<2x16x256xf32>
    %18 = vector.extract_strided_slice %0 {offsets = [0, 2, 0], sizes = [2, 1, 256], strides = [1, 1, 1]} : vector<2x3x256xf32> to vector<2x1x256xf32>
    %19 = vector.extract_strided_slice %2 {offsets = [0, 2], sizes = [16, 1], strides = [1, 1]} : vector<16x3xf32> to vector<16x1xf32>
    %20 = vector.shape_cast %19 : vector<16x1xf32> to vector<1x16x1xf32>
    %21 = vector.broadcast %18 : vector<2x1x256xf32> to vector<2x16x256xf32>
    %22 = vector.broadcast %20 : vector<1x16x1xf32> to vector<2x16x256xf32>
    %23 = arith.mulf %21, %22 : vector<2x16x256xf32>
    %24 = arith.addf %17, %23 : vector<2x16x256xf32>
    %cst = arith.constant dense<0.000000e+00> : vector<16x256xf32>
    %25 = vector.multi_reduction <add>, %24, %cst [0] : vector<2x16x256xf32> to vector<16x256xf32>
    %26 = vector.shape_cast %25 : vector<16x256xf32> to vector<1x16x256xf32>
    %cst_4 = arith.constant dense<0.000000e+00> : vector<1x16xf32>
    %27 = vector.multi_reduction <add>, %26, %cst_4 [2] : vector<1x16x256xf32> to vector<1x16xf32>
    %28 = vector.shape_cast %27 : vector<1x16xf32> to vector<1x16x1xf32>
    %cst_5 = arith.constant 0.001953125 : f32
    %29 = vector.broadcast %cst_5 : f32 to vector<1x16x1xf32>
    %30 = arith.mulf %28, %29 : vector<1x16x1xf32>
    %31 = vector.broadcast %30 : vector<1x16x1xf32> to vector<2x16x256xf32>
    %32 = arith.subf %24, %31 : vector<2x16x256xf32>
    %33 = arith.mulf %32, %32 : vector<2x16x256xf32>
    %cst_6 = arith.constant dense<0.000000e+00> : vector<16x256xf32>
    %34 = vector.multi_reduction <add>, %33, %cst_6 [0] : vector<2x16x256xf32> to vector<16x256xf32>
    %35 = vector.shape_cast %34 : vector<16x256xf32> to vector<1x16x256xf32>
    %cst_7 = arith.constant dense<0.000000e+00> : vector<1x16xf32>
    %36 = vector.multi_reduction <add>, %35, %cst_7 [2] : vector<1x16x256xf32> to vector<1x16xf32>
    %37 = vector.shape_cast %36 : vector<1x16xf32> to vector<1x16x1xf32>
    %cst_8 = arith.constant 0.001953125 : f32
    %38 = vector.broadcast %cst_8 : f32 to vector<1x16x1xf32>
    %39 = arith.mulf %37, %38 : vector<1x16x1xf32>
    %cst_9 = arith.constant 9.99999974E-6 : f32
    %40 = vector.broadcast %cst_9 : f32 to vector<1x16x1xf32>
    %41 = arith.addf %39, %40 : vector<1x16x1xf32>
    %42 = math.rsqrt %41 : vector<1x16x1xf32>
    %43 = vector.shape_cast %3 : vector<16x1xf32> to vector<1x16x1xf32>
    %44 = arith.mulf %43, %42 : vector<1x16x1xf32>
    %45 = vector.broadcast %44 : vector<1x16x1xf32> to vector<2x16x256xf32>
    %46 = arith.mulf %32, %45 : vector<2x16x256xf32>
    %47 = vector.shape_cast %4 : vector<16x1xf32> to vector<1x16x1xf32>
    %48 = vector.broadcast %47 : vector<1x16x1xf32> to vector<2x16x256xf32>
    %49 = arith.addf %46, %48 : vector<2x16x256xf32>
    %cst_10 = arith.constant 0.000000e+00 : f32
    %50 = vector.broadcast %cst_10 : f32 to vector<2x16x256xf32>
    %51 = arith.maximumf %49, %50 : vector<2x16x256xf32>
    %c0_11 = arith.constant 0 : index
    %c0_12 = arith.constant 0 : index
    %c0_13 = arith.constant 0 : index
    %52 = vector.load %arg2[%c0_11, %c0_12, %c0_13] : memref<2x16x256xf32, #tpu.memory_space<vmem>>, vector<2x16x256xf32>
    tpu.vector_store %arg2[%c0_11, %c0_12, %c0_13], %51 {strides = array<i32>} : memref<2x16x256xf32, #tpu.memory_space<vmem>>, vector<2x16x256xf32>,
    return
  }
}

</mosaic_0001>

<llo_original>
// kernel: model_forward.1
$region0: #{model_forward.1}
  #allocation0 [shape = 'u32[]', space=smem, size = 0x4, offset = 0x4, fixed_abs, tag = 'smem constant byte address 0x4 - core index']
  #allocation1 [shape = 'u32[144,128]{1,0:T(1,128)}', space=vmem, size = 0x12000, scoped, tag = 'internal scratch']
  %s0 = inlined_call_operand.vmem [shape: f32[2,3,256], index: 0, kind: input, shape index: {}]
  %s1 = inlined_call_operand.vmem [shape: f32[16,5], index: 1, kind: input, shape index: {}]
  %s2 = inlined_call_operand.vmem [shape: f32[2,16,256], index: 2, kind: output, shape index: {}]
  %s3 = sld [smem:[#allocation0]]
  $region18: #{model_forward.1} parent=0
    _
  %s5 = ssub.s32 1, %s3
  %s6 = scalar_select 0, %s5, %s3
  // Predicated region
  $region2: #{model_forward.1} parent=0 // pred_check
    _
  $region3: #{model_forward.1} parent=0 // pred_check_branch
    %8 = sbr.rel (0) target = $region5
  $region4: #{model_forward.1} parent=0 // pred_region
    _
  $region5: #{model_forward.1} parent=0 // pred_fallthru
    _
  // Predicated region
  $region6: #{model_forward.1} parent=0 // pred_check
    _
  $region7: #{model_forward.1} parent=0 // pred_check_branch
    %10 = sbr.rel (0) target = $region9
  $region8: #{model_forward.1} parent=0 // pred_region
    _
  $region9: #{model_forward.1} parent=0 // pred_fallthru
    _
  %v11 = vld [vmem:[%s0] sm:$0x77]
  %v12 = vld [vmem:[%s0 + $0x8] sm:$0x77]
  %v13 = vld [vmem:[%s1] sm:$0xff]
  %v14 = vld [vmem:[%s1 + $0x8] sm:$0xff]
  %v17 = vlaneseq
  %v18 = vshrl.u32 %v17, 7
  %v19 = vsub.s32 0, %v18
  %v20 = vrot.slane %v11, %v19
  %v21 = vlaneseq
  %v22 = vshrl.u32 %v21, 7
  %v23 = vsub.s32 4, %v22
  %v24 = vrot.slane %v11, %v23
  %v25 = vlaneseq
  %v26 = vshrl.u32 %v25, 7
  %v27 = vsub.s32 0, %v26
  %v28 = vrot.slane %v12, %v27
  %v29 = vlaneseq
  %v30 = vshrl.u32 %v29, 7
  %v31 = vsub.s32 4, %v30
  %v32 = vrot.slane %v12, %v31
  %v37 = vlaneseq
  %v38 = vshrl.u32 %v37, 7
  %v39 = vsub.s32 0, %v38
  %v40 = vrot.slane %v20, %v39
  %v41 = vlaneseq
  %v42 = vshrl.u32 %v41, 7
  %v43 = vsub.s32 0, %v42
  %v44 = vrot.slane %v24, %v43
  %v45 = vlaneseq
  %v46 = vshrl.u32 %v45, 7
  %v47 = vsub.s32 0, %v46
  %v48 = vrot.slane %v28, %v47
  %v49 = vlaneseq
  %v50 = vshrl.u32 %v49, 7
  %v51 = vsub.s32 0, %v50
  %v52 = vrot.slane %v32, %v51
  %54 = vset.pattern.permute.xlu0 0
  %55 = vperm.xlu0 %54, %v13
  %v56 = vpop.permute.xlu0 %55
  %59 = vset.pattern.permute.xlu0 0
  %60 = vperm.xlu0 %59, %v14
  %v61 = vpop.permute.xlu0 %60
  %v63 = vmul.f32 %v40, %v56
  %v64 = vmul.f32 %v44, %v56
  %v65 = vmul.f32 %v40, %v61
  %v66 = vmul.f32 %v44, %v61
  %v67 = vmul.f32 %v48, %v56
  %v68 = vmul.f32 %v52, %v56
  %v69 = vmul.f32 %v48, %v61
  %v70 = vmul.f32 %v52, %v61
  %v71 = vlaneseq
  %v72 = vshrl.u32 %v71, 7
  %v73 = vsub.s32 1, %v72
  %v74 = vrot.slane %v11, %v73
  %v75 = vlaneseq
  %v76 = vshrl.u32 %v75, 7
  %v77 = vsub.s32 5, %v76
  %v78 = vrot.slane %v11, %v77
  %v79 = vlaneseq
  %v80 = vshrl.u32 %v79, 7
  %v81 = vsub.s32 1, %v80
  %v82 = vrot.slane %v12, %v81
  %v83 = vlaneseq
  %v84 = vshrl.u32 %v83, 7
  %v85 = vsub.s32 5, %v84
  %v86 = vrot.slane %v12, %v85
  %v91 = vlaneseq
  %v92 = vshrl.u32 %v91, 7
  %v93 = vsub.s32 1, %v92
  %v94 = vrot.slane %v74, %v93
  %v95 = vlaneseq
  %v96 = vshrl.u32 %v95, 7
  %v97 = vsub.s32 1, %v96
  %v98 = vrot.slane %v78, %v97
  %v99 = vlaneseq
  %v100 = vshrl.u32 %v99, 7
  %v101 = vsub.s32 1, %v100
  %v102 = vrot.slane %v82, %v101
  %v103 = vlaneseq
  %v104 = vshrl.u32 %v103, 7
  %v105 = vsub.s32 1, %v104
  %v106 = vrot.slane %v86, %v105
  %107 = vset.pattern.permute.xlu0 1
  %108 = vperm.xlu0 %107, %v13
  %v109 = vpop.permute.xlu0 %108
  %111 = vset.pattern.permute.xlu0 1
  %112 = vperm.xlu0 %111, %v14
  %v113 = vpop.permute.xlu0 %112
  %v115 = vmul.f32 %v94, %v109
  %v116 = vmul.f32 %v98, %v109
  %v117 = vmul.f32 %v94, %v113
  %v118 = vmul.f32 %v98, %v113
  %v119 = vmul.f32 %v102, %v109
  %v120 = vmul.f32 %v106, %v109
  %v121 = vmul.f32 %v102, %v113
  %v122 = vmul.f32 %v106, %v113
  %v123 = vadd.f32 %v63, %v115
  %v124 = vadd.f32 %v64, %v116
  %v125 = vadd.f32 %v65, %v117
  %v126 = vadd.f32 %v66, %v118
  %v127 = vadd.f32 %v67, %v119
  %v128 = vadd.f32 %v68, %v120
  %v129 = vadd.f32 %v69, %v121
  %v130 = vadd.f32 %v70, %v122
  %v131 = vlaneseq
  %v132 = vshrl.u32 %v131, 7
  %v133 = vsub.s32 2, %v132
  %v134 = vrot.slane %v11, %v133
  %v135 = vlaneseq
  %v136 = vshrl.u32 %v135, 7
  %v137 = vsub.s32 6, %v136
  %v138 = vrot.slane %v11, %v137
  %v139 = vlaneseq
  %v140 = vshrl.u32 %v139, 7
  %v141 = vsub.s32 2, %v140
  %v142 = vrot.slane %v12, %v141
  %v143 = vlaneseq
  %v144 = vshrl.u32 %v143, 7
  %v145 = vsub.s32 6, %v144
  %v146 = vrot.slane %v12, %v145
  %v151 = vlaneseq
  %v152 = vshrl.u32 %v151, 7
  %v153 = vsub.s32 2, %v152
  %v154 = vrot.slane %v134, %v153
  %v155 = vlaneseq
  %v156 = vshrl.u32 %v155, 7
  %v157 = vsub.s32 2, %v156
  %v158 = vrot.slane %v138, %v157
  %v159 = vlaneseq
  %v160 = vshrl.u32 %v159, 7
  %v161 = vsub.s32 2, %v160
  %v162 = vrot.slane %v142, %v161
  %v163 = vlaneseq
  %v164 = vshrl.u32 %v163, 7
  %v165 = vsub.s32 2, %v164
  %v166 = vrot.slane %v146, %v165
  %167 = vset.pattern.permute.xlu0 2
  %168 = vperm.xlu0 %167, %v13
  %v169 = vpop.permute.xlu0 %168
  %171 = vset.pattern.permute.xlu0 2
  %172 = vperm.xlu0 %171, %v14
  %v173 = vpop.permute.xlu0 %172
  %v175 = vmul.f32 %v154, %v169
  %v176 = vmul.f32 %v158, %v169
  %v177 = vmul.f32 %v154, %v173
  %v178 = vmul.f32 %v158, %v173
  %v179 = vmul.f32 %v162, %v169
  %v180 = vmul.f32 %v166, %v169
  %v181 = vmul.f32 %v162, %v173
  %v182 = vmul.f32 %v166, %v173
  %v183 = vadd.f32 %v123, %v175
  %v184 = vadd.f32 %v124, %v176
  %v185 = vadd.f32 %v125, %v177
  %v186 = vadd.f32 %v126, %v178
  %v187 = vadd.f32 %v127, %v179
  %v188 = vadd.f32 %v128, %v180
  %v189 = vadd.f32 %v129, %v181
  %v190 = vadd.f32 %v130, %v182
  %v191 = vadd.f32 %v183, %v187
  %v192 = vadd.f32 %v184, %v188
  %v193 = vadd.f32 %v185, %v189
  %v194 = vadd.f32 %v186, %v190
  %v195 = vadd.f32 %v191, %v192
  %196 = vadd.xlane.f32.xlu0 %v195
  %v197 = vpop.xlane.xlu0 %196
  %v198 = vadd.f32 %v193, %v194
  %199 = vadd.xlane.f32.xlu0 %v198
  %v200 = vpop.xlane.xlu0 %199
  %v201 = vmul.f32 %v197, 0.001953125
  %v202 = vmul.f32 %v200, 0.001953125
  %v203 = vsub.f32 %v183, %v201
  %v204 = vsub.f32 %v184, %v201
  %v205 = vsub.f32 %v185, %v202
  %v206 = vsub.f32 %v186, %v202
  %v207 = vsub.f32 %v187, %v201
  %v208 = vsub.f32 %v188, %v201
  %v209 = vsub.f32 %v189, %v202
  %v210 = vsub.f32 %v190, %v202
  %v211 = vmul.f32 %v203, %v203
  %v212 = vmul.f32 %v204, %v204
  %v213 = vmul.f32 %v205, %v205
  %v214 = vmul.f32 %v206, %v206
  %v215 = vmul.f32 %v207, %v207
  %v216 = vmul.f32 %v208, %v208
  %v217 = vmul.f32 %v209, %v209
  %v218 = vmul.f32 %v210, %v210
  %v219 = vadd.f32 %v211, %v215
  %v220 = vadd.f32 %v212, %v216
  %v221 = vadd.f32 %v213, %v217
  %v222 = vadd.f32 %v214, %v218
  %v223 = vadd.f32 %v219, %v220
  %224 = vadd.xlane.f32.xlu0 %v223
  %v225 = vpop.xlane.xlu0 %224
  %v226 = vadd.f32 %v221, %v222
  %227 = vadd.xlane.f32.xlu0 %v226
  %v228 = vpop.xlane.xlu0 %227
  %v229 = vmul.f32 %v225, 0.001953125
  %v230 = vmul.f32 %v228, 0.001953125
  %v231 = vadd.f32 %v229, 1e-05
  %v232 = vadd.f32 %v230, 1e-05
  %v233 = vrsqrt.pop %v231
  %v234 = vrsqrt.pop %v232
  %v235 = vmul.f32 %v13, %v233
  %v236 = vmul.f32 %v14, %v234
  %238 = vset.pattern.permute.xlu0 3
  %239 = vperm.xlu0 %238, %v235
  %v240 = vpop.permute.xlu0 %239
  %243 = vset.pattern.permute.xlu0 3
  %244 = vperm.xlu0 %243, %v236
  %v245 = vpop.permute.xlu0 %244
  %v247 = vmul.f32 %v203, %v240
  %v248 = vmul.f32 %v204, %v240
  %v249 = vmul.f32 %v205, %v245
  %v250 = vmul.f32 %v206, %v245
  %v251 = vmul.f32 %v207, %v240
  %v252 = vmul.f32 %v208, %v240
  %v253 = vmul.f32 %v209, %v245
  %v254 = vmul.f32 %v210, %v245
  %255 = vset.pattern.permute.xlu0 4
  %256 = vperm.xlu0 %255, %v13
  %v257 = vpop.permute.xlu0 %256
  %259 = vset.pattern.permute.xlu0 4
  %260 = vperm.xlu0 %259, %v14
  %v261 = vpop.permute.xlu0 %260
  %v263 = vadd.f32 %v247, %v257
  %v264 = vadd.f32 %v248, %v257
  %v265 = vadd.f32 %v249, %v261
  %v266 = vadd.f32 %v250, %v261
  %v267 = vadd.f32 %v251, %v257
  %v268 = vadd.f32 %v252, %v257
  %v269 = vadd.f32 %v253, %v261
  %v270 = vadd.f32 %v254, %v261
  %v271 = vmax.f32 %v263, 0.0
  %v272 = vmax.f32 %v264, 0.0
  %v273 = vmax.f32 %v265, 0.0
  %v274 = vmax.f32 %v266, 0.0
  %v275 = vmax.f32 %v267, 0.0
  %v276 = vmax.f32 %v268, 0.0
  %v277 = vmax.f32 %v269, 0.0
  %v278 = vmax.f32 %v270, 0.0
  %279 = vst [vmem:[%s2] sm:$0xff] %v271
  %280 = vst [vmem:[%s2 + $0x8] sm:$0xff] %v272
  %281 = vst [vmem:[%s2 + $0x10] sm:$0xff] %v273
  %282 = vst [vmem:[%s2 + $0x18] sm:$0xff] %v274
  %283 = vst [vmem:[%s2 + $0x20] sm:$0xff] %v275
  %284 = vst [vmem:[%s2 + $0x28] sm:$0xff] %v276
  %285 = vst [vmem:[%s2 + $0x30] sm:$0xff] %v277
  %286 = vst [vmem:[%s2 + $0x38] sm:$0xff] %v278
  // Predicated region
  $region10: #{model_forward.1} parent=0 // pred_check
    _
  $region11: #{model_forward.1} parent=0 // pred_check_branch
    %288 = sbr.rel (0) target = $region13
  $region12: #{model_forward.1} parent=0 // pred_region
    _
  $region13: #{model_forward.1} parent=0 // pred_fallthru
    _
  // Predicated region
  $region14: #{model_forward.1} parent=0 // pred_check
    _
  $region15: #{model_forward.1} parent=0 // pred_check_branch
    %290 = sbr.rel (0) target = $region17
  $region16: #{model_forward.1} parent=0 // pred_region
    _
  $region17: #{model_forward.1} parent=0 // pred_fallthru
    _

</llo_original>
